<compile_context>
chip_gen: v7x
topology: tpu7x:2x2x1
jax: 0.10.0
libtpu: 0.0.40
codegen_flags: <defaults>
</compile_context>

<pallas_src>
import functools

import jax
import jax.numpy as jnp
from jax import lax
from jax.experimental import pallas as pl
from jax.experimental.pallas import tpu as pltpu


def _attn_kernel(w_ref, l_ref, g_ref, c_ref, gout_ref,
                 m_ref, d_ref, acc_ref, *, normalize_attn, total_s):
    # w_ref:    (1, C)          -- 1x1 conv weight (out_channels=1, no bias)
    # l_ref:    (1, C, TS)      -- local-feature spatial tile
    # g_ref:    (1, C, TS)      -- global-feature spatial tile
    # c_ref:    (1, 1, TS)      -- attention logits for this tile
    # gout_ref: (1, 1, C)       -- attended feature row (written on last tile)
    # m_ref:    (1, 1) f32      -- running max (online softmax)
    # d_ref:    (1, 1) f32      -- running denominator
    # acc_ref:  (1, C) f32      -- running un-normalized attended features
    s_idx = pl.program_id(1)
    n_s = pl.num_programs(1)

    l = l_ref[0].astype(jnp.float32)                        # (C, TS)  load once
    x = l + g_ref[0].astype(jnp.float32)                    # (C, TS)
    w = w_ref[...].astype(jnp.float32)                      # (1, C)

    # 1x1 conv == matmul over channels (MXU)
    c = jnp.dot(w, x, preferred_element_type=jnp.float32)   # (1, TS)
    c_ref[0] = c.astype(c_ref.dtype)

    @pl.when(s_idx == 0)
    def _():
        m_ref[...] = jnp.full(m_ref.shape, -jnp.inf, jnp.float32)
        d_ref[...] = jnp.zeros(d_ref.shape, jnp.float32)
        acc_ref[...] = jnp.zeros(acc_ref.shape, jnp.float32)

    if normalize_attn:
        # Online softmax over the flattened spatial axis.
        m_prev = m_ref[...]                                              # (1, 1)
        m_new = jnp.maximum(m_prev, jnp.max(c, axis=-1, keepdims=True))  # (1, 1)
        alpha = jnp.exp(m_prev - m_new)                                  # (1, 1)
        e = jnp.exp(c - m_new)                                           # (1, TS)
        d_ref[...] = alpha * d_ref[...] + jnp.sum(e, axis=-1, keepdims=True)
        # Un-normalized attended features on the MXU:
        #   (1, TS) . (C, TS)^T -> (1, C), contracting over the spatial tile.
        part = lax.dot_general(e, l,
                               dimension_numbers=(((1,), (1,)), ((), ())),
                               preferred_element_type=jnp.float32)       # (1, C)
        acc_ref[...] = alpha * acc_ref[...] + part
        m_ref[...] = m_new
    else:
        a = jax.nn.sigmoid(c)                                            # (1, TS)
        part = lax.dot_general(a, l,
                               dimension_numbers=(((1,), (1,)), ((), ())),
                               preferred_element_type=jnp.float32)       # (1, C)
        acc_ref[...] = acc_ref[...] + part

    @pl.when(s_idx == n_s - 1)
    def _():
        if normalize_attn:
            gout = acc_ref[...] * pl.reciprocal(d_ref[...], approx=False)
        else:
            # adaptive_avg_pool2d to (1,1) == mean over the full spatial extent
            gout = acc_ref[...] * (1.0 / float(total_s))
        gout_ref[0] = gout.astype(gout_ref.dtype)


def _choose_block_s(S, C, itemsize, budget_bytes=8 * 1024 * 1024):
    """Largest spatial tile (multiple of 128, divisor of S) keeping the
    double-buffered l+g input blocks (2 inputs x 2 buffers x C x TS x itemsize)
    under `budget_bytes` -- sized conservatively for v7x's smaller VMEM."""
    max_ts = budget_bytes // (4 * C * itemsize)
    if S <= max_ts or S < 128:
        return S
    ts = min((max_ts // 128) * 128, (S // 128) * 128)
    while ts >= 128:
        if S % ts == 0:
            return ts
        ts -= 128
    # TODO(synk): S has no 128-multiple divisor under the VMEM budget; fall
    # back to a single full-S tile rather than masking a ragged last tile.
    return S


def linear_attention_block(l, g, weight, *, normalize_attn=True, block_s=None):
    """l, g: (N, C, W, H).  weight: (1, C, 1, 1) (PyTorch 1x1-conv weight).

    Returns (c, g_out) with c: (N, 1, W, H), g_out: (N, C), matching the
    PyTorch module's forward().  Inputs may be f32 or bf16; compute is f32.
    """
    N, C, W, H = l.shape
    S = W * H
    l3 = l.reshape(N, C, S)
    g3 = g.reshape(N, C, S)
    w2 = weight.reshape(1, C)

    if block_s is None:
        block_s = _choose_block_s(S, C, jnp.dtype(l.dtype).itemsize)
    assert S % block_s == 0, (S, block_s)
    num_s = S // block_s

    kernel = functools.partial(_attn_kernel,
                               normalize_attn=normalize_attn, total_s=S)

    c_flat, g_out = pl.pallas_call(
        kernel,
        out_shape=(
            jax.ShapeDtypeStruct((N, 1, S), jnp.float32),  # attention logits
            jax.ShapeDtypeStruct((N, 1, C), jnp.float32),  # attended features
        ),
        grid_spec=pltpu.PrefetchScalarGridSpec(
            num_scalar_prefetch=0,
            grid=(N, num_s),
            in_specs=[
                # conv weight: constant block index -> fetched once
                pl.BlockSpec((1, C), lambda n, s: (0, 0)),
                # l / g: one (C, TS) spatial tile per step
                pl.BlockSpec((1, C, block_s), lambda n, s: (n, 0, s)),
                pl.BlockSpec((1, C, block_s), lambda n, s: (n, 0, s)),
            ],
            out_specs=[
                # logits: lane-dense tile, written every step
                pl.BlockSpec((1, 1, block_s), lambda n, s: (n, 0, s)),
                # attended features: resident across the S axis, lane-dense C
                pl.BlockSpec((1, 1, C), lambda n, s: (n, 0, 0)),
            ],
            scratch_shapes=[
                pltpu.VMEM((1, 1), jnp.float32),   # running max
                pltpu.VMEM((1, 1), jnp.float32),   # running denominator
                pltpu.VMEM((1, C), jnp.float32),   # running un-normalized gout
            ],
        ),
        compiler_params=pltpu.CompilerParams(
            dimension_semantics=("parallel", "arbitrary")),
    )(w2, l3, g3)

    return c_flat.reshape(N, 1, W, H), g_out.reshape(N, C)


def _reference(l, g, weight, *, normalize_attn=True):
    """Pure-JAX reference mirroring the PyTorch forward."""
    N, C, W, H = l.shape
    w2 = weight.reshape(1, C)
    x = l + g                                               # (N, C, W, H)
    c = jnp.einsum("oc,nchw->nohw", w2, x)                  # (N, 1, W, H)
    if normalize_attn:
        a = jax.nn.softmax(c.reshape(N, 1, -1), axis=2).reshape(N, 1, W, H)
        gout = (a * l).reshape(N, C, -1).sum(axis=2)
    else:
        a = jax.nn.sigmoid(c)
        gout = (a * l).mean(axis=(2, 3))
    return c, gout


if __name__ == "__main__":
    key = jax.random.PRNGKey(0)
    k_l, k_g, k_w = jax.random.split(key, 3)

    N, C, W, H = 2, 4, 16, 16
    l = jax.random.normal(k_l, (N, C, W, H), dtype=jnp.float32)
    g = jax.random.normal(k_g, (N, C, W, H), dtype=jnp.float32)
    # nn.Conv2d(C, 1, kernel_size=1, bias=False) weight shape: (1, C, 1, 1)
    weight = jax.random.normal(k_w, (1, C, 1, 1), dtype=jnp.float32) * 0.5

    # block_s=128 with S=256 -> 2 spatial tiles: exercises the online softmax.
    for norm in (True, False):
        c_out, g_out = linear_attention_block(
            l, g, weight, normalize_attn=norm, block_s=128)
        jax.block_until_ready((c_out, g_out))

        c_ref, g_ref = _reference(l, g, weight, normalize_attn=norm)
        assert c_out.shape == (N, 1, W, H) and g_out.shape == (N, C)
        assert jnp.allclose(c_out, c_ref, atol=1e-5, rtol=1e-5), norm
        assert jnp.allclose(g_out, g_ref, atol=1e-5, rtol=1e-5), norm

    print("KERNEL_OK")
</pallas_src>

<mosaic_0001>
module attributes {stable_mosaic.version = 11 : i64} {
  func.func @_attn_kernel(%arg0: i32, %arg1: i32, %arg2: memref<1x4xf32, #tpu.memory_space<vmem>>, %arg3: memref<1x4x128xf32, #tpu.memory_space<vmem>>, %arg4: memref<1x4x128xf32, #tpu.memory_space<vmem>>, %arg5: memref<1x1x128xf32, #tpu.memory_space<vmem>>, %arg6: memref<1x1x4xf32, #tpu.memory_space<vmem>>, %arg7: memref<1x1xf32, #tpu.memory_space<vmem>>, %arg8: memref<1x1xf32, #tpu.memory_space<vmem>>, %arg9: memref<1x4xf32, #tpu.memory_space<vmem>>) attributes {dimension_semantics = [#tpu.dimension_semantics<parallel>, #tpu.dimension_semantics<arbitrary>], iteration_bounds = array<i64: 2, 2>, scalar_prefetch = 0 : i64, scratch_operands = 3 : i64, tpu.core_type = #tpu.core_type<tc>, window_params = [{pipeline_mode = #tpu.pipeline_mode<synchronous>, transform_indices = @transform_0, window_bounds = array<i64: 1, 4>}, {transform_indices = @transform_1, window_bounds = array<i64: 1, 4, 128>}, {transform_indices = @transform_2, window_bounds = array<i64: 1, 4, 128>}, {transform_indices = @transform_3, window_bounds = array<i64: 1, 1, 128>}, {transform_indices = @transform_4, window_bounds = array<i64: 1, 1, 4>}]} {
    %c0 = arith.constant 0 : index
    %c0_0 = arith.constant 0 : index
    %c0_1 = arith.constant 0 : index
    %0 = vector.load %arg3[%c0, %c0_0, %c0_1] : memref<1x4x128xf32, #tpu.memory_space<vmem>>, vector<1x4x128xf32>
    %1 = vector.shape_cast %0 : vector<1x4x128xf32> to vector<4x128xf32>
    %c0_2 = arith.constant 0 : index
    %c0_3 = arith.constant 0 : index
    %c0_4 = arith.constant 0 : index
    %2 = vector.load %arg4[%c0_2, %c0_3, %c0_4] : memref<1x4x128xf32, #tpu.memory_space<vmem>>, vector<1x4x128xf32>
    %3 = vector.shape_cast %2 : vector<1x4x128xf32> to vector<4x128xf32>
    %4 = arith.addf %1, %3 : vector<4x128xf32>
    %c0_5 = arith.constant 0 : index
    %c0_6 = arith.constant 0 : index
    %5 = vector.load %arg2[%c0_5, %c0_6] : memref<1x4xf32, #tpu.memory_space<vmem>>, vector<1x4xf32>
    %cst = arith.constant dense<0.000000e+00> : vector<1x128xf32>
    %6 = tpu.matmul %5, %4, %cst {dimension_numbers = #tpu.dot_dimension_numbers<[1], [0], [0], [1], [0, 0, 1, 1], [], []>} : vector<1x4xf32>, vector<4x128xf32>, vector<1x128xf32> -> vector<1x128xf32>
    %c0_7 = arith.constant 0 : index
    %c0_8 = arith.constant 0 : index
    %c0_9 = arith.constant 0 : index
    %7 = vector.load %arg5[%c0_7, %c0_8, %c0_9] : memref<1x1x128xf32, #tpu.memory_space<vmem>>, vector<1x1x128xf32>
    %8 = vector.shape_cast %7 : vector<1x1x128xf32> to vector<1x128xf32>
    %9 = vector.shape_cast %6 : vector<1x128xf32> to vector<1x1x128xf32>
    tpu.vector_store %arg5[%c0_7, %c0_8, %c0_9], %9 {strides = array<i32>} : memref<1x1x128xf32, #tpu.memory_space<vmem>>, vector<1x1x128xf32>,
    %c0_i32 = arith.constant 0 : i32
    %10 = arith.cmpi eq, %arg1, %c0_i32 : i32
    %11 = arith.extui %10 : i1 to i32
    %c0_i32_10 = arith.constant 0 : i32
    %12 = arith.cmpi ne, %11, %c0_i32_10 : i32
    scf.if %12 {
      %cst_27 = arith.constant 0xFF800000 : f32
      %38 = vector.broadcast %cst_27 : f32 to vector<1x1xf32>
      %c0_28 = arith.constant 0 : index
      %c0_29 = arith.constant 0 : index
      %39 = vector.load %arg7[%c0_28, %c0_29] : memref<1x1xf32, #tpu.memory_space<vmem>>, vector<1x1xf32>
      tpu.vector_store %arg7[%c0_28, %c0_29], %38 {strides = array<i32>} : memref<1x1xf32, #tpu.memory_space<vmem>>, vector<1x1xf32>,
      %cst_30 = arith.constant 0.000000e+00 : f32
      %40 = vector.broadcast %cst_30 : f32 to vector<1x1xf32>
      %c0_31 = arith.constant 0 : index
      %c0_32 = arith.constant 0 : index
      %41 = vector.load %arg8[%c0_31, %c0_32] : memref<1x1xf32, #tpu.memory_space<vmem>>, vector<1x1xf32>
      tpu.vector_store %arg8[%c0_31, %c0_32], %40 {strides = array<i32>} : memref<1x1xf32, #tpu.memory_space<vmem>>, vector<1x1xf32>,
      %cst_33 = arith.constant 0.000000e+00 : f32
      %42 = vector.broadcast %cst_33 : f32 to vector<1x4xf32>
      %c0_34 = arith.constant 0 : index
      %c0_35 = arith.constant 0 : index
      %43 = vector.load %arg9[%c0_34, %c0_35] : memref<1x4xf32, #tpu.memory_space<vmem>>, vector<1x4xf32>
      tpu.vector_store %arg9[%c0_34, %c0_35], %42 {strides = array<i32>} : memref<1x4xf32, #tpu.memory_space<vmem>>, vector<1x4xf32>,
    } else {
    }
    %c0_11 = arith.constant 0 : index
    %c0_12 = arith.constant 0 : index
    %13 = vector.load %arg7[%c0_11, %c0_12] : memref<1x1xf32, #tpu.memory_space<vmem>>, vector<1x1xf32>
    %cst_13 = arith.constant dense<0xFF800000> : vector<1xf32>
    %14 = vector.multi_reduction <maximumf>, %6, %cst_13 [1] : vector<1x128xf32> to vector<1xf32>
    %15 = vector.shape_cast %14 : vector<1xf32> to vector<1x1xf32>
    %16 = arith.maximumf %13, %15 : vector<1x1xf32>
    %17 = arith.subf %13, %16 : vector<1x1xf32>
    %18 = math.exp %17 : vector<1x1xf32>
    %19 = vector.broadcast %16 : vector<1x1xf32> to vector<1x128xf32>
    %20 = arith.subf %6, %19 : vector<1x128xf32>
    %21 = math.exp %20 : vector<1x128xf32>
    %c0_14 = arith.constant 0 : index
    %c0_15 = arith.constant 0 : index
    %22 = vector.load %arg8[%c0_14, %c0_15] : memref<1x1xf32, #tpu.memory_space<vmem>>, vector<1x1xf32>
    %23 = arith.mulf %18, %22 : vector<1x1xf32>
    %cst_16 = arith.constant dense<0.000000e+00> : vector<1xf32>
    %24 = vector.multi_reduction <add>, %21, %cst_16 [1] : vector<1x128xf32> to vector<1xf32>
    %25 = vector.shape_cast %24 : vector<1xf32> to vector<1x1xf32>
    %26 = arith.addf %23, %25 : vector<1x1xf32>
    %c0_17 = arith.constant 0 : index
    %c0_18 = arith.constant 0 : index
    %27 = vector.load %arg8[%c0_17, %c0_18] : memref<1x1xf32, #tpu.memory_space<vmem>>, vector<1x1xf32>
    tpu.vector_store %arg8[%c0_17, %c0_18], %26 {strides = array<i32>} : memref<1x1xf32, #tpu.memory_space<vmem>>, vector<1x1xf32>,
    %cst_19 = arith.constant dense<0.000000e+00> : vector<1x4xf32>
    %28 = tpu.matmul %21, %1, %cst_19 {dimension_numbers = #tpu.dot_dimension_numbers<[1], [1], [0], [0], [0, 0, 1, 0], [], []>} : vector<1x128xf32>, vector<4x128xf32>, vector<1x4xf32> -> vector<1x4xf32>
    %c0_20 = arith.constant 0 : index
    %c0_21 = arith.constant 0 : index
    %29 = vector.load %arg9[%c0_20, %c0_21] : memref<1x4xf32, #tpu.memory_space<vmem>>, vector<1x4xf32>
    %30 = vector.broadcast %18 : vector<1x1xf32> to vector<1x4xf32>
    %31 = arith.mulf %30, %29 : vector<1x4xf32>
    %32 = arith.addf %31, %28 : vector<1x4xf32>
    %c0_22 = arith.constant 0 : index
    %c0_23 = arith.constant 0 : index
    %33 = vector.load %arg9[%c0_22, %c0_23] : memref<1x4xf32, #tpu.memory_space<vmem>>, vector<1x4xf32>
    tpu.vector_store %arg9[%c0_22, %c0_23], %32 {strides = array<i32>} : memref<1x4xf32, #tpu.memory_space<vmem>>, vector<1x4xf32>,
    %c0_24 = arith.constant 0 : index
    %c0_25 = arith.constant 0 : index
    %34 = vector.load %arg7[%c0_24, %c0_25] : memref<1x1xf32, #tpu.memory_space<vmem>>, vector<1x1xf32>
    tpu.vector_store %arg7[%c0_24, %c0_25], %16 {strides = array<i32>} : memref<1x1xf32, #tpu.memory_space<vmem>>, vector<1x1xf32>,
    %c1_i32 = arith.constant 1 : i32
    %35 = arith.cmpi eq, %arg1, %c1_i32 : i32
    %36 = arith.extui %35 : i1 to i32
    %c0_i32_26 = arith.constant 0 : i32
    %37 = arith.cmpi ne, %36, %c0_i32_26 : i32
    scf.if %37 {
      %c0_27 = arith.constant 0 : index
      %c0_28 = arith.constant 0 : index
      %38 = vector.load %arg9[%c0_27, %c0_28] : memref<1x4xf32, #tpu.memory_space<vmem>>, vector<1x4xf32>
      %c0_29 = arith.constant 0 : index
      %c0_30 = arith.constant 0 : index
      %39 = vector.load %arg8[%c0_29, %c0_30] : memref<1x1xf32, #tpu.memory_space<vmem>>, vector<1x1xf32>
      %40 = tpu.reciprocal %39 : vector<1x1xf32> -> vector<1x1xf32>
      %41 = vector.broadcast %40 : vector<1x1xf32> to vector<1x4xf32>
      %42 = arith.mulf %38, %41 : vector<1x4xf32>
      %c0_31 = arith.constant 0 : index
      %c0_32 = arith.constant 0 : index
      %c0_33 = arith.constant 0 : index
      %43 = vector.load %arg6[%c0_31, %c0_32, %c0_33] : memref<1x1x4xf32, #tpu.memory_space<vmem>>, vector<1x1x4xf32>
      %44 = vector.shape_cast %43 : vector<1x1x4xf32> to vector<1x4xf32>
      %45 = vector.shape_cast %42 : vector<1x4xf32> to vector<1x1x4xf32>
      tpu.vector_store %arg6[%c0_31, %c0_32, %c0_33], %45 {strides = array<i32>} : memref<1x1x4xf32, #tpu.memory_space<vmem>>, vector<1x1x4xf32>,
    } else {
    }
    return
  }
  func.func @transform_0(%arg0: i32, %arg1: i32) -> (i32, i32) {
    %c0_i32 = arith.constant 0 : i32
    %c0_i32_0 = arith.constant 0 : i32
    %c0_i32_1 = arith.constant 0 : i32
    return %c0_i32, %c0_i32_0 : i32, i32
  }
  func.func @transform_1(%arg0: i32, %arg1: i32) -> (i32, i32, i32) {
    %c0_i32 = arith.constant 0 : i32
    %c0_i32_0 = arith.constant 0 : i32
    return %arg0, %c0_i32, %arg1 : i32, i32, i32
  }
  func.func @transform_2(%arg0: i32, %arg1: i32) -> (i32, i32, i32) {
    %c0_i32 = arith.constant 0 : i32
    %c0_i32_0 = arith.constant 0 : i32
    return %arg0, %c0_i32, %arg1 : i32, i32, i32
  }
  func.func @transform_3(%arg0: i32, %arg1: i32) -> (i32, i32, i32) {
    %c0_i32 = arith.constant 0 : i32
    %c0_i32_0 = arith.constant 0 : i32
    return %arg0, %c0_i32, %arg1 : i32, i32, i32
  }
  func.func @transform_4(%arg0: i32, %arg1: i32) -> (i32, i32, i32) {
    %c0_i32 = arith.constant 0 : i32
    %c0_i32_0 = arith.constant 0 : i32
    %c0_i32_1 = arith.constant 0 : i32
    return %arg0, %c0_i32, %c0_i32_0 : i32, i32, i32
  }
}

</mosaic_0001>

<llo_original>
// kernel: tpu_custom_call.1
$region0: #{tpu_custom_call.1}
  #allocation0 [shape = 'u32[]', space=smem, size = 0x4, offset = 0x4, fixed_abs, tag = 'smem constant byte address 0x4 - core index']
  #allocation1 [shape = 'u32[144,128]{1,0:T(1,128)}', space=vmem, size = 0x12000, scoped, tag = 'internal scratch']
  #allocation2 [shape = 'f32[1,1]{1,0:T(1,128)}', space=vmem, size = 0x200, scoped, tag = 'scratch operand']
  #allocation3 [shape = 'f32[1,1]{1,0:T(1,128)}', space=vmem, size = 0x200, scoped, tag = 'scratch operand']
  #allocation4 [shape = 'f32[1,4]{1,0:T(1,128)}', space=vmem, size = 0x200, scoped, tag = 'scratch operand']
  %s0 = inlined_call_operand.hbm [shape: f32[1,4], index: 0, kind: input, shape index: {}]
  %s1 = inlined_call_operand.hbm [shape: f32[2,4,256], index: 1, kind: input, shape index: {}]
  %s2 = inlined_call_operand.hbm [shape: f32[2,4,256], index: 2, kind: input, shape index: {}]
  %s3 = inlined_call_operand.hbm [shape: f32[2,1,256], index: 3, kind: output, shape index: {0}]
  %s4 = inlined_call_operand.hbm [shape: f32[2,1,4], index: 4, kind: output, shape index: {1}]
  %5 = xla_tuple %s3, %s4
  %s6 = sld [smem:[#allocation0]]
  $region73: #{tpu_custom_call.1} parent=0
    _
  %s8 = ssub.s32 1, %s6
  %s9 = scalar_select 0, %s8, %s6
  $region1: #{tpu_custom_call.1} parent=0
    #allocation5 [shape = 'u8[512]{0}', space=vmem, size = 0x400, scoped, tag = 'input window, operand 0, single buffered']
    #allocation6 [shape = 's32[2]{0}', space=sflag, size = 0x8, scoped, tag = 'scoped memory for tpu_custom_call.1']
    #allocation7 [shape = 's32[2]{0}', space=sflag, size = 0x8, scoped, tag = 'scoped memory for tpu_custom_call.1']
    #allocation8 [shape = 'u8[4096]{0}', space=vmem, size = 0x1000, scoped, tag = 'input window, operand 1']
    #allocation9 [shape = 's32[2]{0}', space=sflag, size = 0x8, scoped, tag = 'scoped memory for tpu_custom_call.1']
    #allocation10 [shape = 'u8[4096]{0}', space=vmem, size = 0x1000, scoped, tag = 'input window, operand 2']
    #allocation11 [shape = 'u8[1024]{0}', space=vmem, size = 0x400, scoped, tag = 'output window, operand 0']
    #allocation12 [shape = 'u8[1024]{0}', space=vmem, size = 0x400, scoped, tag = 'output window, operand 1']
    #allocation13 [shape = 's32[2]{0}', space=sflag, size = 0x8, scoped, tag = 'scoped memory for tpu_custom_call.1']
    %10 = vsyncpa [#allocation6], 0
    %11 = vsyncpa [#allocation9], 0
    %s12 = scalar_lea.sflag [#allocation9], 1
    %13 = vsyncpa %s12, 0
    %14 = vsyncpa [#allocation7], 0
    %s15 = scalar_lea.sflag [#allocation7], 1
    %16 = vsyncpa %s15, 0
    %17 = vsyncpa [#allocation13], 0
    %s18 = scalar_lea.sflag [#allocation13], 1
    %19 = vsyncpa %s18, 0
    loop: start=0, step=1, limit=6
    $region2: #{tpu_custom_call.1} parent=1 // loop_pre_header
      _
    $region3: #{tpu_custom_call.1} parent=1 // loop_header
      %s21 = sphi 0, %s25
      %p22 = scmp.ge.s32.totalorder %s21, 6
      %s28 = sphi 0, %s40
      %s29 = sphi 0, %s36
      %s30 = sphi 0, %s28
      %s31 = sphi 0, %s29
      %s32 = sphi 0, %s30
      %s33 = sphi 0, %s31
      %s41 = sphi 0, %s41
      %s43 = sphi 0, %s41
      %s44 = sphi 0, %s43
      %s58 = sphi 0, %s44
      %s66 = sphi 0, %s68
      %s69 = sphi 0, %s66
      %s70 = sphi 0, %s69
      %s86 = sphi 0, %s70
      %s94 = sphi 0, %s96
      %s97 = sphi 0, %s94
      %s98 = sphi 0, %s97
      %s114 = sphi 0, %s98
      %s122 = sphi 0, %s124
      %s125 = sphi 0, %s122
      %s126 = sphi 0, %s125
      %s142 = sphi 0, %s126
      %s148 = sphi 0, %s150
      %s151 = sphi 0, %s148
      %s152 = sphi 0, %s151
      %s168 = sphi 0, %s152
    $region4: #{tpu_custom_call.1} parent=1 // loop_header_branch
      %24 = sbr.rel (%p22) target = $region8
    $region5: #{tpu_custom_call.1} parent=1 // loop_body
      %s26 = ssub.s32 %s21, 1
      %s27 = ssub.s32 %s21, 2
      %s34 = sadd.s32 1, %s29
      %p35 = scmp.ge.s32.totalorder %s34, 2
      %s36 = scalar_select %p35, 0, %s34
      %s37 = sadd.s32 1, %s28
      %s38 = scalar_select %p35, %s37, %s28
      %p39 = scmp.ge.s32.totalorder %s38, 2
      %s40 = scalar_select %p39, 0, %s38
      %s42 = sadd.s32 %s41, 1
      %p45 = scmp.eq.s32.totalorder %s21, 3
      %p46 = scmp.ne.s32.totalorder %s41, %s43
      %p47 = scmp.eq.s32.totalorder %s21, 0
      %p48 = por %p46, %p47
      %p49 = scmp.ne.s32.totalorder %s41, %s43
      %p50 = scmp.eq.s32.totalorder %s26, 3
      %p51 = por %p49, %p50
      %p52 = scmp.ne.s32.totalorder %s43, %s44
      %p53 = scmp.eq.s32.totalorder %s26, 0
      %p54 = por %p52, %p53
      %p55 = scmp.ne.s32.totalorder %s43, %s44
      %p56 = scmp.eq.s32.totalorder %s27, 3
      %p57 = por %p55, %p56
      %p59 = scmp.ne.s32.totalorder %s44, %s58
      %p60 = scmp.eq.s32.totalorder %s27, 0
      %p61 = por %p59, %p60
      %s62 = ssub.s32 %s28, %s40
      %s63 = ssub.s32 %s29, %s36
      %s64 = sor.u32 %s62, %s63
      %p65 = scmp.eq.s32.totalorder %s64, 0
      %s67 = sadd.s32 %s66, 1
      %s68 = scalar_select %p65, %s66, %s67
      %p71 = pneg %p65
      %p72 = scmp.eq.s32.totalorder %s21, 3
      %p73 = por %p71, %p72
      %p74 = scmp.ne.s32.totalorder %s66, %s69
      %p75 = scmp.eq.s32.totalorder %s21, 0
      %p76 = por %p74, %p75
      %p77 = scmp.ne.s32.totalorder %s66, %s69
      %p78 = scmp.eq.s32.totalorder %s26, 3
      %p79 = por %p77, %p78
      %p80 = scmp.ne.s32.totalorder %s69, %s70
      %p81 = scmp.eq.s32.totalorder %s26, 0
      %p82 = por %p80, %p81
      %p83 = scmp.ne.s32.totalorder %s69, %s70
      %p84 = scmp.eq.s32.totalorder %s27, 3
      %p85 = por %p83, %p84
      %p87 = scmp.ne.s32.totalorder %s70, %s86
      %p88 = scmp.eq.s32.totalorder %s27, 0
      %p89 = por %p87, %p88
      %s90 = ssub.s32 %s28, %s40
      %s91 = ssub.s32 %s29, %s36
      %s92 = sor.u32 %s90, %s91
      %p93 = scmp.eq.s32.totalorder %s92, 0
      %s95 = sadd.s32 %s94, 1
      %s96 = scalar_select %p93, %s94, %s95
      %p99 = pneg %p93
      %p100 = scmp.eq.s32.totalorder %s21, 3
      %p101 = por %p99, %p100
      %p102 = scmp.ne.s32.totalorder %s94, %s97
      %p103 = scmp.eq.s32.totalorder %s21, 0
      %p104 = por %p102, %p103
      %p105 = scmp.ne.s32.totalorder %s94, %s97
      %p106 = scmp.eq.s32.totalorder %s26, 3
      %p107 = por %p105, %p106
      %p108 = scmp.ne.s32.totalorder %s97, %s98
      %p109 = scmp.eq.s32.totalorder %s26, 0
      %p110 = por %p108, %p109
      %p111 = scmp.ne.s32.totalorder %s97, %s98
      %p112 = scmp.eq.s32.totalorder %s27, 3
      %p113 = por %p111, %p112
      %p115 = scmp.ne.s32.totalorder %s98, %s114
      %p116 = scmp.eq.s32.totalorder %s27, 0
      %p117 = por %p115, %p116
      %s118 = ssub.s32 %s28, %s40
      %s119 = ssub.s32 %s29, %s36
      %s120 = sor.u32 %s118, %s119
      %p121 = scmp.eq.s32.totalorder %s120, 0
      %s123 = sadd.s32 %s122, 1
      %s124 = scalar_select %p121, %s122, %s123
      %p127 = pneg %p121
      %p128 = scmp.eq.s32.totalorder %s21, 3
      %p129 = por %p127, %p128
      %p130 = scmp.ne.s32.totalorder %s122, %s125
      %p131 = scmp.eq.s32.totalorder %s21, 0
      %p132 = por %p130, %p131
      %p133 = scmp.ne.s32.totalorder %s122, %s125
      %p134 = scmp.eq.s32.totalorder %s26, 3
      %p135 = por %p133, %p134
      %p136 = scmp.ne.s32.totalorder %s125, %s126
      %p137 = scmp.eq.s32.totalorder %s26, 0
      %p138 = por %p136, %p137
      %p139 = scmp.ne.s32.totalorder %s125, %s126
      %p140 = scmp.eq.s32.totalorder %s27, 3
      %p141 = por %p139, %p140
      %p143 = scmp.ne.s32.totalorder %s126, %s142
      %p144 = scmp.eq.s32.totalorder %s27, 0
      %p145 = por %p143, %p144
      %s146 = ssub.s32 %s28, %s40
      %p147 = scmp.eq.s32.totalorder %s146, 0
      %s149 = sadd.s32 %s148, 1
      %s150 = scalar_select %p147, %s148, %s149
      %p153 = pneg %p147
      %p154 = scmp.eq.s32.totalorder %s21, 3
      %p155 = por %p153, %p154
      %p156 = scmp.ne.s32.totalorder %s148, %s151
      %p157 = scmp.eq.s32.totalorder %s21, 0
      %p158 = por %p156, %p157
      %p159 = scmp.ne.s32.totalorder %s148, %s151
      %p160 = scmp.eq.s32.totalorder %s26, 3
      %p161 = por %p159, %p160
      %p162 = scmp.ne.s32.totalorder %s151, %s152
      %p163 = scmp.eq.s32.totalorder %s26, 0
      %p164 = por %p162, %p163
      %p165 = scmp.ne.s32.totalorder %s151, %s152
      %p166 = scmp.eq.s32.totalorder %s27, 3
      %p167 = por %p165, %p166
      %p169 = scmp.ne.s32.totalorder %s152, %s168
      %p170 = scmp.eq.s32.totalorder %s27, 0
      %p171 = por %p169, %p170
      %p172 = scmp.le.s32.totalorder 1, %s21
      %p173 = scmp.lt.s32.totalorder %s21, 5
      %p174 = pnand %p172, %p173
      %p175 = pneg %p174
      // Predicated region
      $region9: #{tpu_custom_call.1} parent=5 // pred_check
        _
      $region10: #{tpu_custom_call.1} parent=5 // pred_check_branch
        %177 = sbr.rel (%p174) target = $region12
      $region11: #{tpu_custom_call.1} parent=5 // pred_region
        %s178 = ssub.s32 %s21, 1
        // Predicated region
        $region13: #{tpu_custom_call.1} parent=11 // pred_check
          %p179 = pneg %p54
        $region14: #{tpu_custom_call.1} parent=11 // pred_check_branch
          %181 = sbr.rel (%p179) target = $region16
        $region15: #{tpu_custom_call.1} parent=11 // pred_region
          %s183 = ssub.s32 16, 16
          %184 = vsyncadd [#allocation6], %s183
          %s186 = sshll.u32 [#allocation5], 4
          %s187 = int_to_ptr.vmem [resolvable:$true] %s186
          %189 = dma.hbm_to_vmem [thread:$0]  %s0, 16, %s187, [#allocation6]
        $region16: #{tpu_custom_call.1} parent=11 // pred_fallthru
          _
      $region12: #{tpu_custom_call.1} parent=5 // pred_fallthru
        _
      %p190 = scmp.lt.s32.totalorder %s21, 4
      // Predicated region
      $region17: #{tpu_custom_call.1} parent=5 // pred_check
        %p191 = pneg %p190
      $region18: #{tpu_custom_call.1} parent=5 // pred_check_branch
        %193 = sbr.rel (%p191) target = $region20
      $region19: #{tpu_custom_call.1} parent=5 // pred_region
        // Predicated region
        $region21: #{tpu_custom_call.1} parent=19 // pred_check
          %p194 = pneg %p76
        $region22: #{tpu_custom_call.1} parent=19 // pred_check_branch
          %196 = sbr.rel (%p194) target = $region24
        $region23: #{tpu_custom_call.1} parent=19 // pred_region
          %s197 = sand.u32 %s21, 1
          %s198 = scalar_lea.sflag [#allocation9], %s197
          %s199 = sand.u32 %s66, 1
          %s200 = smul.addr %s199, 4
          %s201 = scalar_lea.vmem [#allocation8], %s200
          %s203 = ssub.s32 64, 64
          %204 = vsyncadd %s198, %s203
          %s205 = smul.addr %s28, 2
          %s206 = sadd.s32 %s29, %s205
          %s207 = smul.addr %s206, 64
          %s208 = scalar_lea.hbm %s1, %s207
          %s210 = sshll.u32 %s201, 4
          %s211 = int_to_ptr.vmem [resolvable:$true] %s210
          %213 = dma.hbm_to_vmem [thread:$0]  %s208, 64, %s211, %s198
        $region24: #{tpu_custom_call.1} parent=19 // pred_fallthru
          _
        // Predicated region
        $region25: #{tpu_custom_call.1} parent=19 // pred_check
          %p214 = pneg %p104
        $region26: #{tpu_custom_call.1} parent=19 // pred_check_branch
          %216 = sbr.rel (%p214) target = $region28
        $region27: #{tpu_custom_call.1} parent=19 // pred_region
          %s217 = sand.u32 %s21, 1
          %s218 = scalar_lea.sflag [#allocation9], %s217
          %s219 = sand.u32 %s94, 1
          %s220 = smul.addr %s219, 4
          %s221 = scalar_lea.vmem [#allocation10], %s220
          %s223 = ssub.s32 64, 64
          %224 = vsyncadd %s218, %s223
          %s225 = smul.addr %s28, 2
          %s226 = sadd.s32 %s29, %s225
          %s227 = smul.addr %s226, 64
          %s228 = scalar_lea.hbm %s2, %s227
          %s230 = sshll.u32 %s221, 4
          %s231 = int_to_ptr.vmem [resolvable:$true] %s230
          %233 = dma.hbm_to_vmem [thread:$0]  %s228, 64, %s231, %s218
        $region28: #{tpu_custom_call.1} parent=19 // pred_fallthru
          _
      $region20: #{tpu_custom_call.1} parent=5 // pred_fallthru
        _
      %p234 = scmp.le.s32.totalorder 1, %s21
      %p235 = scmp.lt.s32.totalorder %s21, 5
      %p236 = pnand %p234, %p235
      %p237 = pneg %p236
      // Predicated region
      $region29: #{tpu_custom_call.1} parent=5 // pred_check
        _
      $region30: #{tpu_custom_call.1} parent=5 // pred_check_branch
        %239 = sbr.rel (%p236) target = $region32
      $region31: #{tpu_custom_call.1} parent=5 // pred_region
        %s240 = ssub.s32 %s21, 1
        // Predicated region
        $region33: #{tpu_custom_call.1} parent=31 // pred_check
          %p241 = pneg %p54
        $region34: #{tpu_custom_call.1} parent=31 // pred_check_branch
          %243 = sbr.rel (%p241) target = $region36
        $region35: #{tpu_custom_call.1} parent=31 // pred_region
          %244 = dma.done [#allocation6], 16
        $region36: #{tpu_custom_call.1} parent=31 // pred_fallthru
          _
        %s245 = sand.u32 %s26, 1
        %s246 = scalar_lea.sflag [#allocation9], %s245
        %s247 = sand.u32 %s69, 1
        %s248 = smul.addr %s247, 4
        %s249 = scalar_lea.vmem [#allocation8], %s248
        // Predicated region
        $region37: #{tpu_custom_call.1} parent=31 // pred_check
          %p250 = pneg %p82
        $region38: #{tpu_custom_call.1} parent=31 // pred_check_branch
          %252 = sbr.rel (%p250) target = $region40
        $region39: #{tpu_custom_call.1} parent=31 // pred_region
          %253 = dma.done %s246, 64
        $region40: #{tpu_custom_call.1} parent=31 // pred_fallthru
          _
        %s254 = sand.u32 %s26, 1
        %s255 = scalar_lea.sflag [#allocation9], %s254
        %s256 = sand.u32 %s97, 1
        %s257 = smul.addr %s256, 4
        %s258 = scalar_lea.vmem [#allocation10], %s257
        // Predicated region
        $region41: #{tpu_custom_call.1} parent=31 // pred_check
          %p259 = pneg %p110
        $region42: #{tpu_custom_call.1} parent=31 // pred_check_branch
          %261 = sbr.rel (%p259) target = $region44
        $region43: #{tpu_custom_call.1} parent=31 // pred_region
          %262 = dma.done %s255, 64
        $region44: #{tpu_custom_call.1} parent=31 // pred_fallthru
          _
        %p263 = pneg %p54
        %p264 = pneg %p51
        %s265 = sand.u32 %s26, 1
        %s266 = scalar_lea.sflag [#allocation9], %s265
        %s267 = sand.u32 %s69, 1
        %s268 = smul.addr %s267, 4
        %s269 = scalar_lea.vmem [#allocation8], %s268
        %p270 = pneg %p82
        %p271 = pneg %p79
        %s272 = sand.u32 %s26, 1
        %s273 = scalar_lea.sflag [#allocation9], %s272
        %s274 = sand.u32 %s97, 1
        %s275 = smul.addr %s274, 4
        %s276 = scalar_lea.vmem [#allocation10], %s275
        %p277 = pneg %p110
        %p278 = pneg %p107
        %p279 = pneg %p138
        %p280 = pneg %p135
        %s281 = sand.u32 %s125, 1
        %s282 = scalar_lea.sflag [#allocation7], %s281
        %s283 = sand.u32 %s125, 1
        %s284 = scalar_lea.vmem [#allocation11], %s283
        %p285 = pneg %p164
        %p286 = pneg %p161
        %s287 = sand.u32 %s151, 1
        %s288 = scalar_lea.sflag [#allocation13], %s287
        %s289 = sand.u32 %s151, 1
        %s290 = scalar_lea.vmem [#allocation12], %s289
        %v291 = vld [vmem:[%s249] sm:$0xf]
        %v292 = vld [vmem:[%s258] sm:$0xf]
        %v293 = vadd.f32 %v291, %v292
        %v294 = vld [vmem:[#allocation5] sm:$0x1]
        %vm295 = vcmask 31744
        %v297 = vsel %vm295, %v294, 0
        %vm299 = vcmask 1043456
        %v301 = vsel %vm299, %v293, 0
        %303 = vmatprep.subr.mxu0 0.0
        %304 = vmatpush1.msra.mxu0 %v301
        %305 = vmatprep.subr.mxu0 0.0
        %306 = vmatpush1.msra.mxu0 0.0
        %307 = vmatprep.subr.mxu0 0.0
        %308 = vmatpush1.msra.mxu0 0.0
        %309 = vmatprep.subr.mxu0 0.0
        %310 = vmatpush1.msra.mxu0 0.0
        %311 = vmatprep.subr.mxu0 0.0
        %312 = vmatpush1.msra.mxu0 0.0
        %313 = vmatprep.subr.mxu0 0.0
        %314 = vmatpush1.msra.mxu0 0.0
        %315 = vmatprep.subr.mxu0 0.0
        %316 = vmatpush1.msra.mxu0 0.0
        %317 = vmatprep.subr.mxu0 0.0
        %318 = vmatpush1.msra.mxu0 0.0
        %319 = vmatprep.subr.mxu0 0.0
        %320 = vmatpush1.msra.mxu0 0.0
        %321 = vmatprep.subr.mxu0 0.0
        %322 = vmatpush1.msra.mxu0 0.0
        %323 = vmatprep.subr.mxu0 0.0
        %324 = vmatpush1.msra.mxu0 0.0
        %325 = vmatprep.subr.mxu0 0.0
        %326 = vmatpush1.msra.mxu0 0.0
        %327 = vmatprep.subr.mxu0 0.0
        %328 = vmatpush1.msra.mxu0 0.0
        %329 = vmatprep.subr.mxu0 0.0
        %330 = vmatpush1.msra.mxu0 0.0
        %331 = vmatprep.subr.mxu0 0.0
        %332 = vmatpush1.msra.mxu0 0.0
        %333 = vmatprep.subr.mxu0 0.0
        %334 = vmatpush1.msra.mxu0 0.0
        %335 = vmatprep.subr.mxu0 0.0
        %336 = vmatpush1.msra.mxu0 0.0
        %337 = vmatprep.subr.mxu0 0.0
        %338 = vmatpush1.msra.mxu0 0.0
        %339 = vmatprep.subr.mxu0 0.0
        %340 = vmatpush1.msra.mxu0 0.0
        %341 = vmatprep.subr.mxu0 0.0
        %342 = vmatpush1.msra.mxu0 0.0
        %343 = vmatprep.subr.mxu0 0.0
        %344 = vmatpush1.msra.mxu0 0.0
        %345 = vmatprep.subr.mxu0 0.0
        %346 = vmatpush1.msra.mxu0 0.0
        %347 = vmatprep.subr.mxu0 0.0
        %348 = vmatpush1.msra.mxu0 0.0
        %349 = vmatprep.subr.mxu0 0.0
        %350 = vmatpush1.msra.mxu0 0.0
        %351 = vmatprep.subr.mxu0 0.0
        %352 = vmatpush1.msra.mxu0 0.0
        %353 = vmatprep.subr.mxu0 0.0
        %354 = vmatpush1.msra.mxu0 0.0
        %355 = vmatprep.subr.mxu0 0.0
        %356 = vmatpush1.msra.mxu0 0.0
        %357 = vmatprep.subr.mxu0 0.0
        %358 = vmatpush1.msra.mxu0 0.0
        %359 = vmatprep.subr.mxu0 0.0
        %360 = vmatpush1.msra.mxu0 0.0
        %361 = vmatprep.subr.mxu0 0.0
        %362 = vmatpush1.msra.mxu0 0.0
        %363 = vmatprep.subr.mxu0 0.0
        %364 = vmatpush1.msra.mxu0 0.0
        %365 = vmatprep.subr.mxu0 0.0
        %366 = vmatpush1.msra.mxu0 0.0
        %367 = vmatprep.mubr.f32.mxu0 0.0
        %368 = vmatmul.mubr.f32.gmra.mrb[0].mxu0 %v297
        %v369 = vpop.f32.mrb[0].mxu0
        %v370 = vadd.f32 0.0, %v369
        %v371 = vpop.f32.mrb[0].mxu0
        %372 = vdwg.mxu0
        %373 = vst [vmem:[%s284] sm:$0x1] %v370
        %p374 = scmp.eq.s32.totalorder %s31, 0
        // Predicated region
        $region45: #{tpu_custom_call.1} parent=31 // pred_check
          %p375 = pneg %p374
        $region46: #{tpu_custom_call.1} parent=31 // pred_check_branch
          %377 = sbr.rel (%p375) target = $region48
        $region47: #{tpu_custom_call.1} parent=31 // pred_region
          %vm378 = vcmask 0
          %379 = vst.msk [vmem:[#allocation2] sm:$0x1] %vm378, -inf
          %380 = vst.msk [vmem:[#allocation3] sm:$0x1] %vm378, 0.0
          %vm381 = vcmask 24576
          %382 = vst.msk [vmem:[#allocation4] sm:$0x1] %vm381, 0.0
        $region48: #{tpu_custom_call.1} parent=31 // pred_fallthru
          _
        %v383 = vld [vmem:[#allocation2] sm:$0x1]
        %vm384 = vcmask 1040384
        %v385 = vsel %vm384, %v370, -inf
        %386 = vmax.xlane.f32.xlu0 %v385
        %v387 = vpop.xlane.xlu0 %386
        %v388 = vmax.f32 %v383, %v387
        %v389 = vsub.f32 %v383, %v388
        %v390 = vmul.f32 %v389, 1.442695
        %v391 = vpow.pop %v390
        %393 = vset.pattern.permute.xlu0 0
        %394 = vperm.xlu0 %393, %v388
        %v395 = vpop.permute.xlu0 %394
        %v397 = vlaneseq
        %v398 = vshrl.u32 %v397, 7
        %v399 = vsub.s32 0, %v398
        %v400 = vrot.slane %v395, %v399
        %v401 = vsub.f32 %v370, %v400
        %v402 = vmul.f32 %v401, 1.442695
        %v403 = vpow.pop %v402
        %v404 = vld [vmem:[#allocation3] sm:$0x1]
        %v405 = vmul.f32 %v391, %v404
        %v406 = vsel %vm384, %v403, 0.0
        %407 = vadd.xlane.f32.xlu0 %v406
        %v408 = vpop.xlane.xlu0 %407
        %v409 = vadd.f32 %v405, %v408
        %vm410 = vcmask 0
        %411 = vst.msk [vmem:[#allocation3] sm:$0x1] %vm410, %v409
        %412 = vmatprep.subr.mxu0 0.0
        %413 = vmatpush1.xpose.msra.mxu0 %v291
        %414 = vmatprep.subr.mxu0 0.0
        %415 = vmatpush1.xpose.msra.mxu0 0.0
        %416 = vmatprep.subr.mxu0 0.0
        %417 = vmatpush1.xpose.msra.mxu0 0.0
        %418 = vmatprep.subr.mxu0 0.0
        %419 = vmatpush1.xpose.msra.mxu0 0.0
        %420 = vmatprep.subr.mxu0 0.0
        %421 = vmatpush1.xpose.msra.mxu0 0.0
        %422 = vmatprep.subr.mxu0 0.0
        %423 = vmatpush1.xpose.msra.mxu0 0.0
        %424 = vmatprep.subr.mxu0 0.0
        %425 = vmatpush1.xpose.msra.mxu0 0.0
        %426 = vmatprep.subr.mxu0 0.0
        %427 = vmatpush1.xpose.msra.mxu0 0.0
        %428 = vmatprep.subr.mxu0 0.0
        %429 = vmatpush1.xpose.msra.mxu0 0.0
        %430 = vmatprep.subr.mxu0 0.0
        %431 = vmatpush1.xpose.msra.mxu0 0.0
        %432 = vmatprep.subr.mxu0 0.0
        %433 = vmatpush1.xpose.msra.mxu0 0.0
        %434 = vmatprep.subr.mxu0 0.0
        %435 = vmatpush1.xpose.msra.mxu0 0.0
        %436 = vmatprep.subr.mxu0 0.0
        %437 = vmatpush1.xpose.msra.mxu0 0.0
        %438 = vmatprep.subr.mxu0 0.0
        %439 = vmatpush1.xpose.msra.mxu0 0.0
        %440 = vmatprep.subr.mxu0 0.0
        %441 = vmatpush1.xpose.msra.mxu0 0.0
        %442 = vmatprep.subr.mxu0 0.0
        %443 = vmatpush1.xpose.msra.mxu0 0.0
        %444 = vmatprep.subr.mxu0 0.0
        %445 = vmatpush1.xpose.msra.mxu0 0.0
        %446 = vmatprep.subr.mxu0 0.0
        %447 = vmatpush1.xpose.msra.mxu0 0.0
        %448 = vmatprep.subr.mxu0 0.0
        %449 = vmatpush1.xpose.msra.mxu0 0.0
        %450 = vmatprep.subr.mxu0 0.0
        %451 = vmatpush1.xpose.msra.mxu0 0.0
        %452 = vmatprep.subr.mxu0 0.0
        %453 = vmatpush1.xpose.msra.mxu0 0.0
        %454 = vmatprep.subr.mxu0 0.0
        %455 = vmatpush1.xpose.msra.mxu0 0.0
        %456 = vmatprep.subr.mxu0 0.0
        %457 = vmatpush1.xpose.msra.mxu0 0.0
        %458 = vmatprep.subr.mxu0 0.0
        %459 = vmatpush1.xpose.msra.mxu0 0.0
        %460 = vmatprep.subr.mxu0 0.0
        %461 = vmatpush1.xpose.msra.mxu0 0.0
        %462 = vmatprep.subr.mxu0 0.0
        %463 = vmatpush1.xpose.msra.mxu0 0.0
        %464 = vmatprep.subr.mxu0 0.0
        %465 = vmatpush1.xpose.msra.mxu0 0.0
        %466 = vmatprep.subr.mxu0 0.0
        %467 = vmatpush1.xpose.msra.mxu0 0.0
        %468 = vmatprep.subr.mxu0 0.0
        %469 = vmatpush1.xpose.msra.mxu0 0.0
        %470 = vmatprep.subr.mxu0 0.0
        %471 = vmatpush1.xpose.msra.mxu0 0.0
        %472 = vmatprep.subr.mxu0 0.0
        %473 = vmatpush1.xpose.msra.mxu0 0.0
        %474 = vmatprep.subr.mxu0 0.0
        %475 = vmatpush1.xpose.msra.mxu0 0.0
        %476 = vmatprep.mubr.f32.mxu0 0.0
        %477 = vmatmul.mubr.f32.gmra.mrb[0].mxu0 %v403
        %v478 = vpop.f32.mrb[0].mxu0
        %v479 = vadd.f32 0.0, %v478
        %v480 = vpop.f32.mrb[0].mxu0
        %481 = vdwg.mxu0
        %v482 = vld [vmem:[#allocation4] sm:$0x1]
        %484 = vset.pattern.permute.xlu0 0
        %485 = vperm.xlu0 %484, %v391
        %v486 = vpop.permute.xlu0 %485
        %v488 = vlaneseq
        %v489 = vshrl.u32 %v488, 7
        %v490 = vsub.s32 0, %v489
        %v491 = vrot.slane %v486, %v490
        %v492 = vmul.f32 %v491, %v482
        %v493 = vadd.f32 %v492, %v479
        %vm494 = vcmask 24576
        %495 = vst.msk [vmem:[#allocation4] sm:$0x1] %vm494, %v493
        %496 = vst.msk [vmem:[#allocation2] sm:$0x1] %vm410, %v388
        %p497 = scmp.eq.s32.totalorder %s31, 1
        // Predicated region
        $region49: #{tpu_custom_call.1} parent=31 // pred_check
          %p498 = pneg %p497
        $region50: #{tpu_custom_call.1} parent=31 // pred_check_branch
          %500 = sbr.rel (%p498) target = $region52
        $region51: #{tpu_custom_call.1} parent=31 // pred_region
          %v501 = vld [vmem:[#allocation4] sm:$0x1]
          %v502 = vld [vmem:[#allocation3] sm:$0x1]
          %v503 = vrcp.pop %v502
          %505 = vset.pattern.permute.xlu0 0
          %506 = vperm.xlu0 %505, %v503
          %v507 = vpop.permute.xlu0 %506
          %v509 = vlaneseq
          %v510 = vshrl.u32 %v509, 7
          %v511 = vsub.s32 0, %v510
          %v512 = vrot.slane %v507, %v511
          %v513 = vmul.f32 %v501, %v512
          %514 = vst.msk [vmem:[%s290] sm:$0x1] %vm494, %v513
        $region52: #{tpu_custom_call.1} parent=31 // pred_fallthru
          _
        %s515 = sand.u32 %s125, 1
        %s516 = scalar_lea.sflag [#allocation7], %s515
        %s517 = sand.u32 %s125, 1
        %s518 = scalar_lea.vmem [#allocation11], %s517
        %s519 = sand.u32 %s151, 1
        %s520 = scalar_lea.sflag [#allocation13], %s519
        %s521 = sand.u32 %s151, 1
        %s522 = scalar_lea.vmem [#allocation12], %s521
        // Predicated region
        $region53: #{tpu_custom_call.1} parent=31 // pred_check
          %p523 = pneg %p135
        $region54: #{tpu_custom_call.1} parent=31 // pred_check_branch
          %525 = sbr.rel (%p523) target = $region56
        $region55: #{tpu_custom_call.1} parent=31 // pred_region
          %s527 = ssub.s32 16, 16
          %528 = vsyncadd %s516, %s527
          %s529 = smul.addr %s30, 2
          %s530 = sadd.s32 %s31, %s529
          %s531 = smul.addr %s530, 16
          %s532 = scalar_lea.hbm %s3, %s531
          %s534 = sshll.u32 %s518, 4
          %s535 = int_to_ptr.vmem [resolvable:$true] %s534
          %537 = dma.vmem_to_hbm [thread:$0]  %s535, 16, %s532, %s516
        $region56: #{tpu_custom_call.1} parent=31 // pred_fallthru
          _
        // Predicated region
        $region57: #{tpu_custom_call.1} parent=31 // pred_check
          %p538 = pneg %p161
        $region58: #{tpu_custom_call.1} parent=31 // pred_check_branch
          %540 = sbr.rel (%p538) target = $region60
        $region59: #{tpu_custom_call.1} parent=31 // pred_region
          %s542 = ssub.s32 16, 16
          %543 = vsyncadd %s520, %s542
          %s544 = smul.addr %s30, 16
          %s545 = scalar_lea.hbm %s4, %s544
          %s547 = sshll.u32 %s522, 4
          %s548 = int_to_ptr.vmem [resolvable:$true] %s547
          %550 = dma.vmem_to_hbm [thread:$0]  %s548, 16, %s545, %s520
        $region60: #{tpu_custom_call.1} parent=31 // pred_fallthru
          _
      $region32: #{tpu_custom_call.1} parent=5 // pred_fallthru
        _
      %p551 = scmp.le.s32.totalorder 2, %s21
      // Predicated region
      $region61: #{tpu_custom_call.1} parent=5 // pred_check
        %p552 = pneg %p551
      $region62: #{tpu_custom_call.1} parent=5 // pred_check_branch
        %554 = sbr.rel (%p552) target = $region64
      $region63: #{tpu_custom_call.1} parent=5 // pred_region
        %s555 = ssub.s32 %s21, 2
        // Predicated region
        $region65: #{tpu_custom_call.1} parent=63 // pred_check
          %p556 = pneg %p141
        $region66: #{tpu_custom_call.1} parent=63 // pred_check_branch
          %558 = sbr.rel (%p556) target = $region68
        $region67: #{tpu_custom_call.1} parent=63 // pred_region
          %s559 = sand.u32 %s126, 1
          %s560 = scalar_lea.sflag [#allocation7], %s559
          %s561 = sand.u32 %s126, 1
          %s562 = scalar_lea.vmem [#allocation11], %s561
          %563 = dma.done %s560, 16
        $region68: #{tpu_custom_call.1} parent=63 // pred_fallthru
          _
        // Predicated region
        $region69: #{tpu_custom_call.1} parent=63 // pred_check
          %p564 = pneg %p167
        $region70: #{tpu_custom_call.1} parent=63 // pred_check_branch
          %566 = sbr.rel (%p564) target = $region72
        $region71: #{tpu_custom_call.1} parent=63 // pred_region
          %s567 = sand.u32 %s152, 1
          %s568 = scalar_lea.sflag [#allocation13], %s567
          %s569 = sand.u32 %s152, 1
          %s570 = scalar_lea.vmem [#allocation12], %s569
          %571 = dma.done %s568, 16
        $region72: #{tpu_custom_call.1} parent=63 // pred_fallthru
          _
      $region64: #{tpu_custom_call.1} parent=5 // pred_fallthru
        _
    $region6: #{tpu_custom_call.1} parent=1 // loop_footer
      %s25 = sadd.s32 1, %s21
    $region7: #{tpu_custom_call.1} parent=1 // loop_footer_branch
      %20 = sbr.rel target = $region3
    $region8: #{tpu_custom_call.1} parent=1 // loop_exit
      _
    %572 = vsyncpa [#allocation6], 1
    %s573 = scalar_lea.sflag [#allocation6], 1
    %574 = vsyncpa %s573, 1
    %575 = vsyncpa [#allocation9], 1
    %s576 = scalar_lea.sflag [#allocation9], 1
    %577 = vsyncpa %s576, 1
    %578 = vsyncpa [#allocation7], 1
    %s579 = scalar_lea.sflag [#allocation7], 1
    %580 = vsyncpa %s579, 1
    %581 = vsyncpa [#allocation13], 1
    %s582 = scalar_lea.sflag [#allocation13], 1
    %583 = vsyncpa %s582, 1

</llo_original>
